<compile_context>
chip_gen: v5e
topology: v5e:2x2
jax: 0.10.0
libtpu: 0.0.40
codegen_flags: <defaults>
</compile_context>

<pallas_src>
import functools

import jax
import jax.numpy as jnp
import numpy as np
from jax import lax
from jax.experimental import pallas as pl
from jax.experimental.pallas import tpu as pltpu


def _conv_bn_relu_kernel(x_ref, w_ref, scale_ref, bias_ref, o_ref,
                         *, stride, bt, ho, wpc, nwc_pad):
    """One batch-block per grid step.

    x_ref:     (bt, stride, HR, Wp*Cin)   bf16 phase-split padded input rows
    w_ref:     (3, Wp*Cin, nwc_pad)       bf16 banded weights (one band matrix per kh)
    scale_ref: (1, nwc_pad)               f32 folded BN scale (tiled over Wo, zero in pad)
    bias_ref:  (1, nwc_pad)               f32 folded BN bias  (conv bias folded in)
    o_ref:     (bt, Ho, nwc_pad)          output block (lane dim multiple of 128)
    """
    x = x_ref[...]                          # full-block loads only
    w = w_ref[...]
    m = bt * ho

    acc = jnp.zeros((m, nwc_pad), jnp.float32)
    for kh in range(3):                     # 3 lane-dense MXU matmuls, K = Wp*Cin
        phase, row0 = kh % stride, kh // stride
        xk = x[:, phase, row0:row0 + ho, :].reshape(m, wpc)      # unit-stride value slice
        acc = acc + jnp.dot(xk, w[kh], preferred_element_type=jnp.float32)

    y = jnp.maximum(acc * scale_ref[...] + bias_ref[...], 0.0)   # folded BN + ReLU (f32)
    o_ref[...] = y.reshape(bt, ho, nwc_pad).astype(o_ref.dtype)  # unmasked lane-dense vst


def depthwise_conv_block(x_nchw, w_oihw, b_conv, gamma, beta, run_mean, run_var,
                         *, stride=1, eps=1e-5, batch_block=1,
                         compute_dtype=jnp.bfloat16):
    """Conv2d(k=3, stride, pad=1) -> BatchNorm2d (eval) -> ReLU.  NCHW in / NCHW out."""
    B, Cin, H, W = x_nchw.shape
    Cout = w_oihw.shape[0]
    Ho = (H - 1) // stride + 1
    Wo = (W - 1) // stride + 1
    Hp, Wp = H + 2, W + 2
    bt = batch_block
    assert B % bt == 0, "batch must be divisible by batch_block"

    wpc = Wp * Cin
    nwc = Wo * Cout
    nwc_pad = ((nwc + 127) // 128) * 128        # lane-dense (multiple of 128) output columns

    # ---- wrapper glue (plain JAX): layout, padding, phase split, BN fold, band weights ----
    # TODO(synk): when chaining blocks, keep activations NHWC end-to-end and drop the
    #             per-layer NCHW<->NHWC transposes / re-pad HBM round trips.
    x_nhwc = jnp.transpose(x_nchw, (0, 2, 3, 1))
    x_pad = jnp.pad(x_nhwc, ((0, 0), (1, 1), (1, 1), (0, 0)))            # (B, Hp, Wp, Cin)
    hp_pad = ((Hp + stride - 1) // stride) * stride
    if hp_pad != Hp:
        x_pad = jnp.pad(x_pad, ((0, 0), (0, hp_pad - Hp), (0, 0), (0, 0)))
    hr = hp_pad // stride
    # padded row h = r*stride + p   ->   phases[b, p, r, :]
    x_ph = jnp.transpose(x_pad.reshape(B, hr, stride, wpc), (0, 2, 1, 3))
    x_ph = x_ph.astype(compute_dtype)                                    # (B, stride, hr, wpc)

    # Banded weights: Wband[kh, wp*Cin+c, j*Cout+co] = w[co,c,kh,kw]  iff  wp == j*stride+kw
    w_hwio = jnp.transpose(w_oihw, (2, 3, 1, 0)).astype(jnp.float32)     # (3, 3, Cin, Cout)
    wp_idx = jnp.arange(Wp)
    j_idx = jnp.arange(Wo)
    kw_idx = jnp.arange(3)
    sel = (wp_idx[None, :, None] ==
           j_idx[None, None, :] * stride + kw_idx[:, None, None]).astype(jnp.float32)  # (3,Wp,Wo)
    w_band = jnp.einsum("kwj,hkcd->hwcjd", sel, w_hwio)                  # (3, Wp, Cin, Wo, Cout)
    w_band = w_band.reshape(3, wpc, nwc)
    if nwc_pad != nwc:                                                   # zero pad columns
        w_band = jnp.pad(w_band, ((0, 0), (0, 0), (0, nwc_pad - nwc)))
    w_band = w_band.astype(compute_dtype)

    # Fold BN (inference) + conv bias into per-channel scale/bias, tiled lane-dense.
    scale = gamma / jnp.sqrt(run_var + eps)
    bias = beta + scale * (b_conv - run_mean)
    scale_t = jnp.tile(scale, Wo).reshape(1, nwc).astype(jnp.float32)
    bias_t = jnp.tile(bias, Wo).reshape(1, nwc).astype(jnp.float32)
    if nwc_pad != nwc:
        scale_t = jnp.pad(scale_t, ((0, 0), (0, nwc_pad - nwc)))
        bias_t = jnp.pad(bias_t, ((0, 0), (0, nwc_pad - nwc)))

    kernel = functools.partial(_conv_bn_relu_kernel, stride=stride, bt=bt,
                               ho=Ho, wpc=wpc, nwc_pad=nwc_pad)

    out_flat = pl.pallas_call(
        kernel,
        out_shape=jax.ShapeDtypeStruct((B, Ho, nwc_pad), x_nchw.dtype),
        grid=(B // bt,),
        in_specs=[
            pl.BlockSpec((bt, stride, hr, wpc), lambda b: (b, 0, 0, 0)),
            pl.BlockSpec((3, wpc, nwc_pad), lambda b: (0, 0, 0)),
            pl.BlockSpec((1, nwc_pad), lambda b: (0, 0)),
            pl.BlockSpec((1, nwc_pad), lambda b: (0, 0)),
        ],
        out_specs=pl.BlockSpec((bt, Ho, nwc_pad), lambda b: (b, 0, 0)),
        compiler_params=pltpu.CompilerParams(
            dimension_semantics=("parallel",),          # batch axis: both v7x TCs when grid even
            vmem_limit_bytes=32 * 1024 * 1024,          # explicit & safe within v7x's 64 MiB VMEM
        ),
    )(x_ph, w_band, scale_t, bias_t)

    out_nhwc = out_flat[:, :, :nwc].reshape(B, Ho, Wo, Cout)             # drop lane padding
    return jnp.transpose(out_nhwc, (0, 3, 1, 2))                         # back to NCHW


def _reference(x_nchw, w_oihw, b_conv, gamma, beta, run_mean, run_var,
               *, stride, eps=1e-5, compute_dtype=jnp.bfloat16):
    """Pure-JAX reference with the same bf16-input / f32-accumulate numerics."""
    x = jnp.transpose(x_nchw, (0, 2, 3, 1)).astype(compute_dtype)
    w_hwio = jnp.transpose(w_oihw, (2, 3, 1, 0)).astype(compute_dtype)
    y = lax.conv_general_dilated(
        x, w_hwio, window_strides=(stride, stride), padding=[(1, 1), (1, 1)],
        dimension_numbers=("NHWC", "HWIO", "NHWC"),
        preferred_element_type=jnp.float32)
    scale = gamma / jnp.sqrt(run_var + eps)
    bias = beta + scale * (b_conv - run_mean)
    y = jnp.maximum(y * scale + bias, 0.0)
    return jnp.transpose(y, (0, 3, 1, 2)).astype(x_nchw.dtype)


if __name__ == "__main__":
    # Deterministic synthetic parameters (module __init__ shapes).
    B, Cin, Cout, H, W = 2, 4, 8, 16, 16
    key = jax.random.PRNGKey(0)
    kx, kw, kb, kg, kbe, km, kv = jax.random.split(key, 7)

    x = jax.random.normal(kx, (B, Cin, H, W), dtype=jnp.float32)
    w = jax.random.normal(kw, (Cout, Cin, 3, 3), dtype=jnp.float32) * 0.1
    b_conv = jax.random.normal(kb, (Cout,), dtype=jnp.float32) * 0.05
    gamma = 1.0 + 0.1 * jax.random.normal(kg, (Cout,), dtype=jnp.float32)
    beta = 0.05 * jax.random.normal(kbe, (Cout,), dtype=jnp.float32)
    run_mean = 0.1 * jax.random.normal(km, (Cout,), dtype=jnp.float32)
    run_var = 0.5 + jax.random.uniform(kv, (Cout,), dtype=jnp.float32)

    ok = True
    for stride in (1, 2):
        out = jax.block_until_ready(
            depthwise_conv_block(x, w, b_conv, gamma, beta, run_mean, run_var,
                                 stride=stride))
        ref = jax.block_until_ready(
            _reference(x, w, b_conv, gamma, beta, run_mean, run_var, stride=stride))
        err = float(np.max(np.abs(np.asarray(out, np.float32) - np.asarray(ref, np.float32))))
        if out.shape != ref.shape or not np.isfinite(err) or err > 1e-2:
            ok = False
            print(f"MISMATCH at stride={stride}: shape {out.shape} vs {ref.shape}, "
                  f"max err {err}")

    if ok:
        print("KERNEL_OK")
</pallas_src>

<mosaic_0001>
module attributes {stable_mosaic.version = 11 : i64} {
  func.func @_conv_bn_relu_kernel(%arg0: i32, %arg1: memref<1x1x18x72xbf16, #tpu.memory_space<vmem>>, %arg2: memref<3x72x128xbf16, #tpu.memory_space<vmem>>, %arg3: memref<1x128xf32, #tpu.memory_space<vmem>>, %arg4: memref<1x128xf32, #tpu.memory_space<vmem>>, %arg5: memref<1x16x128xf32, #tpu.memory_space<vmem>>) attributes {dimension_semantics = [#tpu.dimension_semantics<parallel>], iteration_bounds = array<i64: 2>, scalar_prefetch = 0 : i64, scratch_operands = 0 : i64, tpu.core_type = #tpu.core_type<tc>, window_params = [{transform_indices = @transform_0, window_bounds = array<i64: 1, 1, 18, 72>}, {pipeline_mode = #tpu.pipeline_mode<synchronous>, transform_indices = @transform_1, window_bounds = array<i64: 3, 72, 128>}, {pipeline_mode = #tpu.pipeline_mode<synchronous>, transform_indices = @transform_2, window_bounds = array<i64: 1, 128>}, {pipeline_mode = #tpu.pipeline_mode<synchronous>, transform_indices = @transform_3, window_bounds = array<i64: 1, 128>}, {transform_indices = @transform_4, window_bounds = array<i64: 1, 16, 128>}]} {
    %c0 = arith.constant 0 : index
    %c0_0 = arith.constant 0 : index
    %c0_1 = arith.constant 0 : index
    %c0_2 = arith.constant 0 : index
    %0 = vector.load %arg1[%c0, %c0_0, %c0_1, %c0_2] : memref<1x1x18x72xbf16, #tpu.memory_space<vmem>>, vector<1x1x18x72xbf16>
    %c0_3 = arith.constant 0 : index
    %c0_4 = arith.constant 0 : index
    %c0_5 = arith.constant 0 : index
    %1 = vector.load %arg2[%c0_3, %c0_4, %c0_5] : memref<3x72x128xbf16, #tpu.memory_space<vmem>>, vector<3x72x128xbf16>
    %cst = arith.constant 0.000000e+00 : f32
    %2 = vector.broadcast %cst : f32 to vector<16x128xf32>
    %3 = vector.extract_strided_slice %0 {offsets = [0, 0, 0, 0], sizes = [1, 1, 16, 72], strides = [1, 1, 1, 1]} : vector<1x1x18x72xbf16> to vector<1x1x16x72xbf16>
    %4 = vector.shape_cast %3 : vector<1x1x16x72xbf16> to vector<1x16x72xbf16>
    %5 = vector.shape_cast %4 : vector<1x16x72xbf16> to vector<16x72xbf16>
    %6 = vector.extract_strided_slice %1 {offsets = [0, 0, 0], sizes = [1, 72, 128], strides = [1, 1, 1]} : vector<3x72x128xbf16> to vector<1x72x128xbf16>
    %7 = vector.shape_cast %6 : vector<1x72x128xbf16> to vector<72x128xbf16>
    %cst_6 = arith.constant dense<0.000000e+00> : vector<16x128xf32>
    %8 = tpu.matmul %5, %7, %cst_6 {dimension_numbers = #tpu.dot_dimension_numbers<[1], [0], [0], [1], [0, 0, 1, 1], [], []>} : vector<16x72xbf16>, vector<72x128xbf16>, vector<16x128xf32> -> vector<16x128xf32>
    %9 = arith.addf %2, %8 : vector<16x128xf32>
    %10 = vector.extract_strided_slice %0 {offsets = [0, 0, 1, 0], sizes = [1, 1, 16, 72], strides = [1, 1, 1, 1]} : vector<1x1x18x72xbf16> to vector<1x1x16x72xbf16>
    %11 = vector.shape_cast %10 : vector<1x1x16x72xbf16> to vector<1x16x72xbf16>
    %12 = vector.shape_cast %11 : vector<1x16x72xbf16> to vector<16x72xbf16>
    %13 = vector.extract_strided_slice %1 {offsets = [1, 0, 0], sizes = [1, 72, 128], strides = [1, 1, 1]} : vector<3x72x128xbf16> to vector<1x72x128xbf16>
    %14 = vector.shape_cast %13 : vector<1x72x128xbf16> to vector<72x128xbf16>
    %cst_7 = arith.constant dense<0.000000e+00> : vector<16x128xf32>
    %15 = tpu.matmul %12, %14, %cst_7 {dimension_numbers = #tpu.dot_dimension_numbers<[1], [0], [0], [1], [0, 0, 1, 1], [], []>} : vector<16x72xbf16>, vector<72x128xbf16>, vector<16x128xf32> -> vector<16x128xf32>
    %16 = arith.addf %9, %15 : vector<16x128xf32>
    %17 = vector.extract_strided_slice %0 {offsets = [0, 0, 2, 0], sizes = [1, 1, 16, 72], strides = [1, 1, 1, 1]} : vector<1x1x18x72xbf16> to vector<1x1x16x72xbf16>
    %18 = vector.shape_cast %17 : vector<1x1x16x72xbf16> to vector<1x16x72xbf16>
    %19 = vector.shape_cast %18 : vector<1x16x72xbf16> to vector<16x72xbf16>
    %20 = vector.extract_strided_slice %1 {offsets = [2, 0, 0], sizes = [1, 72, 128], strides = [1, 1, 1]} : vector<3x72x128xbf16> to vector<1x72x128xbf16>
    %21 = vector.shape_cast %20 : vector<1x72x128xbf16> to vector<72x128xbf16>
    %cst_8 = arith.constant dense<0.000000e+00> : vector<16x128xf32>
    %22 = tpu.matmul %19, %21, %cst_8 {dimension_numbers = #tpu.dot_dimension_numbers<[1], [0], [0], [1], [0, 0, 1, 1], [], []>} : vector<16x72xbf16>, vector<72x128xbf16>, vector<16x128xf32> -> vector<16x128xf32>
    %23 = arith.addf %16, %22 : vector<16x128xf32>
    %c0_9 = arith.constant 0 : index
    %c0_10 = arith.constant 0 : index
    %24 = vector.load %arg3[%c0_9, %c0_10] : memref<1x128xf32, #tpu.memory_space<vmem>>, vector<1x128xf32>
    %25 = vector.broadcast %24 : vector<1x128xf32> to vector<16x128xf32>
    %26 = arith.mulf %23, %25 : vector<16x128xf32>
    %c0_11 = arith.constant 0 : index
    %c0_12 = arith.constant 0 : index
    %27 = vector.load %arg4[%c0_11, %c0_12] : memref<1x128xf32, #tpu.memory_space<vmem>>, vector<1x128xf32>
    %28 = vector.broadcast %27 : vector<1x128xf32> to vector<16x128xf32>
    %29 = arith.addf %26, %28 : vector<16x128xf32>
    %cst_13 = arith.constant 0.000000e+00 : f32
    %30 = vector.broadcast %cst_13 : f32 to vector<16x128xf32>
    %31 = arith.maximumf %29, %30 : vector<16x128xf32>
    %32 = vector.shape_cast %31 : vector<16x128xf32> to vector<1x16x128xf32>
    %c0_14 = arith.constant 0 : index
    %c0_15 = arith.constant 0 : index
    %c0_16 = arith.constant 0 : index
    %33 = vector.load %arg5[%c0_14, %c0_15, %c0_16] : memref<1x16x128xf32, #tpu.memory_space<vmem>>, vector<1x16x128xf32>
    tpu.vector_store %arg5[%c0_14, %c0_15, %c0_16], %32 {strides = array<i32>} : memref<1x16x128xf32, #tpu.memory_space<vmem>>, vector<1x16x128xf32>,
    return
  }
  func.func @transform_0(%arg0: i32) -> (i32, i32, i32, i32) {
    %c0_i32 = arith.constant 0 : i32
    %c0_i32_0 = arith.constant 0 : i32
    %c0_i32_1 = arith.constant 0 : i32
    %c0_i32_2 = arith.constant 0 : i32
    return %arg0, %c0_i32, %c0_i32_0, %c0_i32_1 : i32, i32, i32, i32
  }
  func.func @transform_1(%arg0: i32) -> (i32, i32, i32) {
    %c0_i32 = arith.constant 0 : i32
    %c0_i32_0 = arith.constant 0 : i32
    %c0_i32_1 = arith.constant 0 : i32
    %c0_i32_2 = arith.constant 0 : i32
    return %c0_i32, %c0_i32_0, %c0_i32_1 : i32, i32, i32
  }
  func.func @transform_2(%arg0: i32) -> (i32, i32) {
    %c0_i32 = arith.constant 0 : i32
    %c0_i32_0 = arith.constant 0 : i32
    %c0_i32_1 = arith.constant 0 : i32
    return %c0_i32, %c0_i32_0 : i32, i32
  }
  func.func @transform_3(%arg0: i32) -> (i32, i32) {
    %c0_i32 = arith.constant 0 : i32
    %c0_i32_0 = arith.constant 0 : i32
    %c0_i32_1 = arith.constant 0 : i32
    return %c0_i32, %c0_i32_0 : i32, i32
  }
  func.func @transform_4(%arg0: i32) -> (i32, i32, i32) {
    %c0_i32 = arith.constant 0 : i32
    %c0_i32_0 = arith.constant 0 : i32
    %c0_i32_1 = arith.constant 0 : i32
    return %arg0, %c0_i32, %c0_i32_0 : i32, i32, i32
  }
}

</mosaic_0001>

<llo_original>
// kernel: tpu_custom_call.1
$region0: #{tpu_custom_call.1}
  #allocation0 [shape = 'u32[]', space=smem, size = 0x4, offset = 0x4, fixed_abs, tag = 'smem constant byte address 0x4 - core index']
  #allocation1 [shape = 'u32[72,128]{1,0:T(1,128)}', space=vmem, size = 0x9000, scoped, tag = 'internal scratch']
  %s0 = inlined_call_operand.vmem [shape: bf16[2,1,18,72], index: 0, kind: input, shape index: {}]
  %s1 = inlined_call_operand.hbm [shape: bf16[3,72,128], index: 1, kind: input, shape index: {}]
  %s2 = inlined_call_operand.vmem [shape: f32[1,128], index: 2, kind: input, shape index: {}]
  %s3 = inlined_call_operand.vmem [shape: f32[1,128], index: 3, kind: input, shape index: {}]
  %s4 = inlined_call_operand.hbm [shape: f32[2,16,128], index: 4, kind: output, shape index: {}]
  %s5 = sld [smem:[#allocation0]]
  $region53: #{tpu_custom_call.1} parent=0
    _
  %s7 = ssub.s32 1, %s5
  %s8 = scalar_select 0, %s7, %s5
  $region1: #{tpu_custom_call.1} parent=0
    #allocation2 [shape = 'u8[55296]{0}', space=vmem, size = 0xd800, scoped, tag = 'input window, operand 1, single buffered']
    #allocation3 [shape = 's32[2]{0}', space=sflag, size = 0x8, scoped, tag = 'scoped memory for tpu_custom_call.1']
    #allocation4 [shape = 's32[2]{0}', space=sflag, size = 0x8, scoped, tag = 'scoped memory for tpu_custom_call.1']
    #allocation5 [shape = 'u8[16384]{0}', space=vmem, size = 0x4000, scoped, tag = 'output window, operand 0']
    %9 = vsyncpa [#allocation3], 0
    %10 = vsyncpa [#allocation4], 0
    %s11 = scalar_lea.sflag [#allocation4], 1
    %12 = vsyncpa %s11, 0
    loop: start=0, step=1, limit=4
    $region2: #{tpu_custom_call.1} parent=1 // loop_pre_header
      _
    $region3: #{tpu_custom_call.1} parent=1 // loop_header
      %s14 = sphi 0, %s18
      %p15 = scmp.ge.s32.totalorder %s14, 4
      %s24 = sphi 0, %s26
      %s27 = sphi 0, %s24
      %s28 = sphi 0, %s27
      %s44 = sphi 0, %s28
      %s48 = sphi 0, %s48
      %s50 = sphi 0, %s48
      %s51 = sphi 0, %s50
      %s65 = sphi 0, %s51
      %s69 = sphi 0, %s69
      %s71 = sphi 0, %s69
      %s72 = sphi 0, %s71
      %s86 = sphi 0, %s72
      %s90 = sphi 0, %s90
      %s92 = sphi 0, %s90
      %s93 = sphi 0, %s92
      %s107 = sphi 0, %s93
      %s113 = sphi 0, %s115
      %s116 = sphi 0, %s113
      %s117 = sphi 0, %s116
      %s133 = sphi 0, %s117
    $region4: #{tpu_custom_call.1} parent=1 // loop_header_branch
      %17 = sbr.rel (%p15) target = $region8
    $region5: #{tpu_custom_call.1} parent=1 // loop_body
      %s19 = ssub.s32 %s14, 1
      %s20 = ssub.s32 %s14, 2
      %s21 = sadd.s32 %s14, 1
      %s22 = ssub.s32 %s14, %s21
      %p23 = scmp.eq.s32.totalorder %s22, 0
      %s25 = sadd.s32 %s24, 1
      %s26 = scalar_select %p23, %s24, %s25
      %p29 = pneg %p23
      %p30 = scmp.eq.s32.totalorder %s14, 1
      %p31 = por %p29, %p30
      %p32 = scmp.ne.s32.totalorder %s24, %s27
      %p33 = scmp.eq.s32.totalorder %s14, 0
      %p34 = por %p32, %p33
      %p35 = scmp.ne.s32.totalorder %s24, %s27
      %p36 = scmp.eq.s32.totalorder %s19, 1
      %p37 = por %p35, %p36
      %p38 = scmp.ne.s32.totalorder %s27, %s28
      %p39 = scmp.eq.s32.totalorder %s19, 0
      %p40 = por %p38, %p39
      %p41 = scmp.ne.s32.totalorder %s27, %s28
      %p42 = scmp.eq.s32.totalorder %s20, 1
      %p43 = por %p41, %p42
      %p45 = scmp.ne.s32.totalorder %s28, %s44
      %p46 = scmp.eq.s32.totalorder %s20, 0
      %p47 = por %p45, %p46
      %s49 = sadd.s32 %s48, 1
      %p52 = scmp.eq.s32.totalorder %s14, 1
      %p53 = scmp.ne.s32.totalorder %s48, %s50
      %p54 = scmp.eq.s32.totalorder %s14, 0
      %p55 = por %p53, %p54
      %p56 = scmp.ne.s32.totalorder %s48, %s50
      %p57 = scmp.eq.s32.totalorder %s19, 1
      %p58 = por %p56, %p57
      %p59 = scmp.ne.s32.totalorder %s50, %s51
      %p60 = scmp.eq.s32.totalorder %s19, 0
      %p61 = por %p59, %p60
      %p62 = scmp.ne.s32.totalorder %s50, %s51
      %p63 = scmp.eq.s32.totalorder %s20, 1
      %p64 = por %p62, %p63
      %p66 = scmp.ne.s32.totalorder %s51, %s65
      %p67 = scmp.eq.s32.totalorder %s20, 0
      %p68 = por %p66, %p67
      %s70 = sadd.s32 %s69, 1
      %p73 = scmp.eq.s32.totalorder %s14, 1
      %p74 = scmp.ne.s32.totalorder %s69, %s71
      %p75 = scmp.eq.s32.totalorder %s14, 0
      %p76 = por %p74, %p75
      %p77 = scmp.ne.s32.totalorder %s69, %s71
      %p78 = scmp.eq.s32.totalorder %s19, 1
      %p79 = por %p77, %p78
      %p80 = scmp.ne.s32.totalorder %s71, %s72
      %p81 = scmp.eq.s32.totalorder %s19, 0
      %p82 = por %p80, %p81
      %p83 = scmp.ne.s32.totalorder %s71, %s72
      %p84 = scmp.eq.s32.totalorder %s20, 1
      %p85 = por %p83, %p84
      %p87 = scmp.ne.s32.totalorder %s72, %s86
      %p88 = scmp.eq.s32.totalorder %s20, 0
      %p89 = por %p87, %p88
      %s91 = sadd.s32 %s90, 1
      %p94 = scmp.eq.s32.totalorder %s14, 1
      %p95 = scmp.ne.s32.totalorder %s90, %s92
      %p96 = scmp.eq.s32.totalorder %s14, 0
      %p97 = por %p95, %p96
      %p98 = scmp.ne.s32.totalorder %s90, %s92
      %p99 = scmp.eq.s32.totalorder %s19, 1
      %p100 = por %p98, %p99
      %p101 = scmp.ne.s32.totalorder %s92, %s93
      %p102 = scmp.eq.s32.totalorder %s19, 0
      %p103 = por %p101, %p102
      %p104 = scmp.ne.s32.totalorder %s92, %s93
      %p105 = scmp.eq.s32.totalorder %s20, 1
      %p106 = por %p104, %p105
      %p108 = scmp.ne.s32.totalorder %s93, %s107
      %p109 = scmp.eq.s32.totalorder %s20, 0
      %p110 = por %p108, %p109
      %s111 = ssub.s32 %s14, %s21
      %p112 = scmp.eq.s32.totalorder %s111, 0
      %s114 = sadd.s32 %s113, 1
      %s115 = scalar_select %p112, %s113, %s114
      %p118 = pneg %p112
      %p119 = scmp.eq.s32.totalorder %s14, 1
      %p120 = por %p118, %p119
      %p121 = scmp.ne.s32.totalorder %s113, %s116
      %p122 = scmp.eq.s32.totalorder %s14, 0
      %p123 = por %p121, %p122
      %p124 = scmp.ne.s32.totalorder %s113, %s116
      %p125 = scmp.eq.s32.totalorder %s19, 1
      %p126 = por %p124, %p125
      %p127 = scmp.ne.s32.totalorder %s116, %s117
      %p128 = scmp.eq.s32.totalorder %s19, 0
      %p129 = por %p127, %p128
      %p130 = scmp.ne.s32.totalorder %s116, %s117
      %p131 = scmp.eq.s32.totalorder %s20, 1
      %p132 = por %p130, %p131
      %p134 = scmp.ne.s32.totalorder %s117, %s133
      %p135 = scmp.eq.s32.totalorder %s20, 0
      %p136 = por %p134, %p135
      %p137 = scmp.le.s32.totalorder 1, %s14
      %p138 = scmp.lt.s32.totalorder %s14, 3
      %p139 = pnand %p137, %p138
      %p140 = pneg %p139
      // Predicated region
      $region9: #{tpu_custom_call.1} parent=5 // pred_check
        _
      $region10: #{tpu_custom_call.1} parent=5 // pred_check_branch
        %142 = sbr.rel (%p139) target = $region12
      $region11: #{tpu_custom_call.1} parent=5 // pred_region
        %s143 = ssub.s32 %s14, 1
        // Predicated region
        $region13: #{tpu_custom_call.1} parent=11 // pred_check
          %p144 = pneg %p61
        $region14: #{tpu_custom_call.1} parent=11 // pred_check_branch
          %146 = sbr.rel (%p144) target = $region16
        $region15: #{tpu_custom_call.1} parent=11 // pred_region
          %148 = vsyncadd [#allocation3], 0
          %s149 = sshll.u32 %s1, 4
          %s150 = int_to_ptr.hbm [resolvable:$true] %s149
          %s151 = sshll.u32 [#allocation2], 4
          %s152 = int_to_ptr.vmem [resolvable:$true] %s151
          %157 = dma.hbm_to_vmem [thread:$0]  %s150, 1728, %s152, [#allocation3], 64, 64, 4
        $region16: #{tpu_custom_call.1} parent=11 // pred_fallthru
          _
        // Predicated region
        $region17: #{tpu_custom_call.1} parent=11 // pred_check
          %p158 = pneg %p82
        $region18: #{tpu_custom_call.1} parent=11 // pred_check_branch
          %160 = sbr.rel (%p158) target = $region20
        $region19: #{tpu_custom_call.1} parent=11 // pred_region
          _
        $region20: #{tpu_custom_call.1} parent=11 // pred_fallthru
          _
        // Predicated region
        $region21: #{tpu_custom_call.1} parent=11 // pred_check
          %p161 = pneg %p103
        $region22: #{tpu_custom_call.1} parent=11 // pred_check_branch
          %163 = sbr.rel (%p161) target = $region24
        $region23: #{tpu_custom_call.1} parent=11 // pred_region
          _
        $region24: #{tpu_custom_call.1} parent=11 // pred_fallthru
          _
      $region12: #{tpu_custom_call.1} parent=5 // pred_fallthru
        _
      %p164 = scmp.lt.s32.totalorder %s14, 2
      // Predicated region
      $region25: #{tpu_custom_call.1} parent=5 // pred_check
        %p165 = pneg %p164
      $region26: #{tpu_custom_call.1} parent=5 // pred_check_branch
        %167 = sbr.rel (%p165) target = $region28
      $region27: #{tpu_custom_call.1} parent=5 // pred_region
        // Predicated region
        $region29: #{tpu_custom_call.1} parent=27 // pred_check
          %p168 = pneg %p34
        $region30: #{tpu_custom_call.1} parent=27 // pred_check_branch
          %170 = sbr.rel (%p168) target = $region32
        $region31: #{tpu_custom_call.1} parent=27 // pred_region
          %p171 = scmp.lt.s32.totalorder %s14, 1
          %s172 = scalar_select %p171, %s14, 1
          %s173 = smul.addr %s172, 3
          %s174 = smul.addr %s173, 4
          %s175 = scalar_lea.vmem %s0, %s174
        $region32: #{tpu_custom_call.1} parent=27 // pred_fallthru
          _
      $region28: #{tpu_custom_call.1} parent=5 // pred_fallthru
        _
      %p176 = scmp.le.s32.totalorder 1, %s14
      %p177 = scmp.lt.s32.totalorder %s14, 3
      %p178 = pnand %p176, %p177
      %p179 = pneg %p178
      // Predicated region
      $region33: #{tpu_custom_call.1} parent=5 // pred_check
        _
      $region34: #{tpu_custom_call.1} parent=5 // pred_check_branch
        %181 = sbr.rel (%p178) target = $region36
      $region35: #{tpu_custom_call.1} parent=5 // pred_region
        %s182 = ssub.s32 %s14, 1
        // Predicated region
        $region37: #{tpu_custom_call.1} parent=35 // pred_check
          %p183 = pneg %p61
        $region38: #{tpu_custom_call.1} parent=35 // pred_check_branch
          %185 = sbr.rel (%p183) target = $region40
        $region39: #{tpu_custom_call.1} parent=35 // pred_region
          %187 = dma.done [#allocation3], 1728
        $region40: #{tpu_custom_call.1} parent=35 // pred_fallthru
          _
        %p188 = scmp.lt.s32.totalorder %s19, 1
        %s189 = scalar_select %p188, %s19, 1
        %s190 = smul.addr %s189, 3
        %s191 = smul.addr %s190, 4
        %s192 = scalar_lea.vmem %s0, %s191
        %p193 = pneg %p40
        %p194 = pneg %p37
        %p195 = pneg %p61
        %p196 = pneg %p58
        %p197 = pneg %p82
        %p198 = pneg %p79
        %p199 = pneg %p103
        %p200 = pneg %p100
        %p201 = pneg %p129
        %p202 = pneg %p126
        %s203 = sand.u32 %s116, 1
        %s204 = scalar_lea.sflag [#allocation4], %s203
        %s205 = sand.u32 %s116, 1
        %s206 = smul.addr %s205, 16
        %s207 = scalar_lea.vmem [#allocation5], %s206
        %p208 = scmp.lt.s32.totalorder %s19, 1
        %s209 = scalar_select %p208, %s19, 1
        %s210 = smul.addr %s209, 3
        %s211 = smul.addr %s210, 4
        %s212 = scalar_lea.vmem %s0, %s211
        %v214 = vld [vmem:[%s212] sm:$0xf]
        %v215 = vld [vmem:[%s212 + $0x4] sm:$0xf]
        %v216 = vld [vmem:[%s212 + $0x8] sm:$0x1]
        %v217 = vld [vmem:[#allocation2] sm:$0xf]
        %v218 = vld [vmem:[#allocation2 + $0x4] sm:$0xf]
        %v219 = vld [vmem:[#allocation2 + $0x8] sm:$0xf]
        %v220 = vld [vmem:[#allocation2 + $0xc] sm:$0xf]
        %v221 = vld [vmem:[#allocation2 + $0x10] sm:$0xf]
        %v222 = vld [vmem:[#allocation2 + $0x14] sm:$0xf]
        %v223 = vld [vmem:[#allocation2 + $0x18] sm:$0xf]
        %v224 = vld [vmem:[#allocation2 + $0x1c] sm:$0xf]
        %v225 = vld [vmem:[#allocation2 + $0x20] sm:$0xf]
        %v226 = vld [vmem:[#allocation2 + $0x24] sm:$0xf]
        %v227 = vld [vmem:[#allocation2 + $0x28] sm:$0xf]
        %v228 = vld [vmem:[#allocation2 + $0x2c] sm:$0xf]
        %v229 = vld [vmem:[#allocation2 + $0x30] sm:$0xf]
        %v230 = vld [vmem:[#allocation2 + $0x34] sm:$0xf]
        %v231 = vld [vmem:[#allocation2 + $0x38] sm:$0xf]
        %v232 = vld [vmem:[#allocation2 + $0x3c] sm:$0xf]
        %v233 = vld [vmem:[#allocation2 + $0x40] sm:$0xf]
        %v234 = vld [vmem:[#allocation2 + $0x44] sm:$0xf]
        %v235 = vld [vmem:[#allocation2 + $0x48] sm:$0xf]
        %v236 = vld [vmem:[#allocation2 + $0x4c] sm:$0xf]
        %v237 = vld [vmem:[#allocation2 + $0x50] sm:$0xf]
        %v238 = vld [vmem:[#allocation2 + $0x54] sm:$0xf]
        %v239 = vld [vmem:[#allocation2 + $0x58] sm:$0xf]
        %v240 = vld [vmem:[#allocation2 + $0x5c] sm:$0xf]
        %v241 = vld [vmem:[#allocation2 + $0x60] sm:$0xf]
        %v242 = vld [vmem:[#allocation2 + $0x64] sm:$0xf]
        %v243 = vld [vmem:[#allocation2 + $0x68] sm:$0xf]
        %v247 = vunpack.c.l.b16 %v214
        %v248 = vunpack.c.l.b16 %v215
        %v249 = vunpack.c.l.b16 %v216
        %v250 = vpack.c.b16 %v248, %v247
        %v251 = vpack.c.b16 %v249, %v249
        %vm252 = vsmask.f32 7424
        %v254 = vshrl.u32 %v250, 16
        %v256 = vshll.u32 %v250, 16
        %v258 = vrot.slane %v256, 1
        %v259 = vor.u32 %v254, %v258
        %v261 = vshll.u32 %v251, 16
        %v263 = vrot.slane %v261, 1
        %v264 = vsel %vm252, %v259, %v263
        %v274 = vunpack.c.l.b16 %v226
        %v275 = vunpack.c.l.b16 %v227
        %v276 = vunpack.c.l.b16 %v228
        %v277 = vunpack.c.l.b16 %v229
        %v278 = vunpack.c.l.b16 %v230
        %v279 = vunpack.c.l.b16 %v231
        %v280 = vunpack.c.l.b16 %v232
        %v281 = vunpack.c.l.b16 %v233
        %v282 = vunpack.c.l.b16 %v234
        %v283 = vpack.c.b16 %v275, %v274
        %v284 = vpack.c.b16 %v277, %v276
        %v285 = vpack.c.b16 %v279, %v278
        %v286 = vpack.c.b16 %v281, %v280
        %v287 = vpack.c.b16 %v282, %v282
        %vm292 = vcmask 588800
        %v294 = vsel %vm292, %v264, 0
        %vm296 = vcmask 1043456
        %v298 = vsel %vm296, %v287, 0
        %300 = vmatpush.bf16.msra.mxu0 0
        %301 = vmatpush.bf16.msra.mxu0 0
        %302 = vmatpush.bf16.msra.mxu0 0
        %303 = vmatpush.bf16.msra.mxu0 %v298
        %304 = vmatpush.bf16.msra.mxu0 %v286
        %305 = vmatpush.bf16.msra.mxu0 %v285
        %306 = vmatpush.bf16.msra.mxu0 %v284
        %307 = vmatpush.bf16.msra.mxu0 %v283
        %308 = vmatmul.bf16.gmra.mxu0 %v294
        %v309 = vpop.f32.mrf.mxu0
        %v310 = vadd.f32 0.0, %v309
        %v311 = vpop.f32.mrf.mxu0
        %v312 = vadd.f32 0.0, %v311
        %313 = vdwg.mxu0
        %v323 = vunpack.c.l.b16 %v217
        %v324 = vunpack.c.l.b16 %v218
        %v325 = vunpack.c.l.b16 %v219
        %v326 = vunpack.c.l.b16 %v220
        %v327 = vunpack.c.l.b16 %v221
        %v328 = vunpack.c.l.b16 %v222
        %v329 = vunpack.c.l.b16 %v223
        %v330 = vunpack.c.l.b16 %v224
        %v331 = vunpack.c.l.b16 %v225
        %v332 = vpack.c.b16 %v324, %v323
        %v333 = vpack.c.b16 %v326, %v325
        %v334 = vpack.c.b16 %v328, %v327
        %v335 = vpack.c.b16 %v330, %v329
        %v336 = vpack.c.b16 %v331, %v331
        %v341 = vsel %vm292, %v250, 0
        %v344 = vsel %vm296, %v336, 0
        %346 = vmatpush.bf16.msra.mxu0 0
        %347 = vmatpush.bf16.msra.mxu0 0
        %348 = vmatpush.bf16.msra.mxu0 0
        %349 = vmatpush.bf16.msra.mxu0 %v344
        %350 = vmatpush.bf16.msra.mxu0 %v335
        %351 = vmatpush.bf16.msra.mxu0 %v334
        %352 = vmatpush.bf16.msra.mxu0 %v333
        %353 = vmatpush.bf16.msra.mxu0 %v332
        %354 = vmatmul.bf16.gmra.mxu0 %v341
        %v355 = vpop.f32.mrf.mxu0
        %v356 = vadd.f32 %v310, %v355
        %v357 = vpop.f32.mrf.mxu0
        %v358 = vadd.f32 %v312, %v357
        %359 = vdwg.mxu0
        %vm360 = vcmask 1046528
        %v361 = vrot.slane %v250, 1
        %v362 = vrot.slane %v251, 1
        %v363 = vsel %vm360, %v361, %v362
        %v373 = vunpack.c.l.b16 %v235
        %v374 = vunpack.c.l.b16 %v236
        %v375 = vunpack.c.l.b16 %v237
        %v376 = vunpack.c.l.b16 %v238
        %v377 = vunpack.c.l.b16 %v239
        %v378 = vunpack.c.l.b16 %v240
        %v379 = vunpack.c.l.b16 %v241
        %v380 = vunpack.c.l.b16 %v242
        %v381 = vunpack.c.l.b16 %v243
        %v382 = vpack.c.b16 %v374, %v373
        %v383 = vpack.c.b16 %v376, %v375
        %v384 = vpack.c.b16 %v378, %v377
        %v385 = vpack.c.b16 %v380, %v379
        %v386 = vpack.c.b16 %v381, %v381
        %v392 = vsel %vm292, %v363, 0
        %v395 = vsel %vm296, %v386, 0
        %397 = vmatpush.bf16.msra.mxu0 0
        %398 = vmatpush.bf16.msra.mxu0 0
        %399 = vmatpush.bf16.msra.mxu0 0
        %400 = vmatpush.bf16.msra.mxu0 %v395
        %401 = vmatpush.bf16.msra.mxu0 %v385
        %402 = vmatpush.bf16.msra.mxu0 %v384
        %403 = vmatpush.bf16.msra.mxu0 %v383
        %404 = vmatpush.bf16.msra.mxu0 %v382
        %405 = vmatmul.bf16.gmra.mxu0 %v392
        %v406 = vpop.f32.mrf.mxu0
        %v407 = vadd.f32 0.0, %v406
        %v408 = vpop.f32.mrf.mxu0
        %v409 = vadd.f32 0.0, %v408
        %410 = vdwg.mxu0
        %v411 = vadd.f32 %v356, %v407
        %v412 = vadd.f32 %v358, %v409
        %v413 = vld [vmem:[%s2] sm:$0x1]
        %v415 = vperm.slane %v413, 0
        %v417 = vmul.f32 %v411, %v415
        %v418 = vmul.f32 %v412, %v415
        %v419 = vld [vmem:[%s3] sm:$0x1]
        %v421 = vperm.slane %v419, 0
        %v423 = vadd.f32 %v417, %v421
        %v424 = vadd.f32 %v418, %v421
        %v425 = vmax.f32 %v423, 0.0
        %v426 = vmax.f32 %v424, 0.0
        %427 = vst [vmem:[%s207] sm:$0xff] %v425
        %428 = vst [vmem:[%s207 + $0x8] sm:$0xff] %v426
        %s429 = sand.u32 %s116, 1
        %s430 = scalar_lea.sflag [#allocation4], %s429
        %s431 = sand.u32 %s116, 1
        %s432 = smul.addr %s431, 16
        %s433 = scalar_lea.vmem [#allocation5], %s432
        // Predicated region
        $region41: #{tpu_custom_call.1} parent=35 // pred_check
          %p434 = pneg %p126
        $region42: #{tpu_custom_call.1} parent=35 // pred_check_branch
          %436 = sbr.rel (%p434) target = $region44
        $region43: #{tpu_custom_call.1} parent=35 // pred_region
          %438 = vsyncadd %s430, 0
          %s439 = smul.addr %s19, 2
          %s440 = smul.addr %s439, 8
          %s441 = scalar_lea.hbm %s4, %s440
          %s442 = sshll.u32 %s433, 4
          %s443 = int_to_ptr.vmem [resolvable:$true] %s442
          %s444 = sshll.u32 %s441, 4
          %s445 = int_to_ptr.hbm [resolvable:$true] %s444
          %450 = dma.vmem_to_hbm [thread:$0]  %s443, 256, %s445, %s430, 128, 128, 8
        $region44: #{tpu_custom_call.1} parent=35 // pred_fallthru
          _
      $region36: #{tpu_custom_call.1} parent=5 // pred_fallthru
        _
      %p451 = scmp.le.s32.totalorder 2, %s14
      // Predicated region
      $region45: #{tpu_custom_call.1} parent=5 // pred_check
        %p452 = pneg %p451
      $region46: #{tpu_custom_call.1} parent=5 // pred_check_branch
        %454 = sbr.rel (%p452) target = $region48
      $region47: #{tpu_custom_call.1} parent=5 // pred_region
        %s455 = ssub.s32 %s14, 2
        // Predicated region
        $region49: #{tpu_custom_call.1} parent=47 // pred_check
          %p456 = pneg %p132
        $region50: #{tpu_custom_call.1} parent=47 // pred_check_branch
          %458 = sbr.rel (%p456) target = $region52
        $region51: #{tpu_custom_call.1} parent=47 // pred_region
          %s459 = sand.u32 %s117, 1
          %s460 = scalar_lea.sflag [#allocation4], %s459
          %s461 = sand.u32 %s117, 1
          %s462 = smul.addr %s461, 16
          %s463 = scalar_lea.vmem [#allocation5], %s462
          %465 = dma.done %s460, 256
        $region52: #{tpu_custom_call.1} parent=47 // pred_fallthru
          _
      $region48: #{tpu_custom_call.1} parent=5 // pred_fallthru
        _
    $region6: #{tpu_custom_call.1} parent=1 // loop_footer
      %s18 = sadd.s32 1, %s14
    $region7: #{tpu_custom_call.1} parent=1 // loop_footer_branch
      %13 = sbr.rel target = $region3
    $region8: #{tpu_custom_call.1} parent=1 // loop_exit
      _
    %466 = vsyncpa [#allocation3], 1
    %s467 = scalar_lea.sflag [#allocation3], 1
    %468 = vsyncpa %s467, 1
    %469 = vsyncpa [#allocation4], 1
    %s470 = scalar_lea.sflag [#allocation4], 1
    %471 = vsyncpa %s470, 1

</llo_original>
